<compile_context>
chip_gen: v5e
topology: v5e:2x2
jax: 0.10.0
libtpu: 0.0.40
codegen_flags: <defaults>
</compile_context>

<pallas_src>
import math
from typing import NamedTuple, Optional

import jax
import jax.numpy as jnp
from jax.experimental import pallas as pl
from jax.experimental.pallas import tpu as pltpu

_MIB = 1024 * 1024


def _round_up(x, m):
    return (x + m - 1) // m * m


def _cdiv(a, b):
    return -(-a // b)


def _gelu_tanh(x):
    # PyTorch nn.GELU(approximate='tanh'):
    # 0.5 * x * (1 + tanh(sqrt(2/pi) * (x + 0.044715 * x^3)))
    c = math.sqrt(2.0 / math.pi)
    return 0.5 * x * (1.0 + jnp.tanh(c * (x + 0.044715 * x * x * x)))


# ---------------------------------------------------------------------------
# Generation-aware hardware parameters
# ---------------------------------------------------------------------------
def tpu_hw_params():
    """Tiling knobs per TPU generation (token-tile target, TH floor/cap,
    weight-tile budget, VMEM limit, weight buffer depth, cores per chip)."""
    kind = ""
    try:
        kind = jax.devices()[0].device_kind.lower()
    except Exception:
        pass
    if "v7" in kind:
        gen = "v7x"
    elif "v6" in kind:
        gen = "v6e"
    elif "v5p" in kind:
        gen = "other"
    elif "v5" in kind:
        gen = "v5e"
    else:
        gen = "other"

    if gen == "v5e":
        hw = dict(gen=gen, tm_target=384, tm_multiple=128, th_floor=256,
                  th_cap=512, weight_budget=8 * _MIB, vmem_limit=96 * _MIB,
                  weight_buffers=2, num_cores=1)
    elif gen == "v6e":
        hw = dict(gen=gen, tm_target=768, tm_multiple=256, th_floor=512,
                  th_cap=1024, weight_budget=16 * _MIB, vmem_limit=100 * _MIB,
                  weight_buffers=3, num_cores=1)
    elif gen == "v7x":
        hw = dict(gen=gen, tm_target=512, tm_multiple=256, th_floor=256,
                  th_cap=512, weight_budget=6 * _MIB, vmem_limit=48 * _MIB,
                  weight_buffers=2, num_cores=2)
    else:
        # Conservative defaults that also fit a 64 MiB-VMEM part.
        hw = dict(gen=gen, tm_target=512, tm_multiple=256, th_floor=256,
                  th_cap=512, weight_budget=6 * _MIB, vmem_limit=48 * _MIB,
                  weight_buffers=2, num_cores=1)

    # Never exceed ~80% of physical VMEM when we can query it.
    try:
        cap = int(pltpu.get_tpu_info().vmem_capacity_bytes)
        usable = int(cap * 0.80)
        if gen == "other":
            hw["vmem_limit"] = max(hw["vmem_limit"], min(usable, 100 * _MIB))
        hw["vmem_limit"] = min(hw["vmem_limit"], usable)
    except Exception:
        pass
    return hw


# ---------------------------------------------------------------------------
# Parameter preparation (padding hoisted off the per-forward path)
# ---------------------------------------------------------------------------
class MLPParams(NamedTuple):
    w1: jax.Array   # (D_pad, H_pad)  c_fc weight, (in, out) layout
    b1: jax.Array   # (1, H_pad)
    w2: jax.Array   # (H_pad, D_pad)  c_proj weight, (in, out) layout
    b2: jax.Array   # (1, D_pad)
    d: int          # original n_embd
    d_pad: int
    h_pad: int
    th: int         # hidden tile


def prepare_mlp_params(w1, b1, w2, b2, *, compute_dtype=None, hw=None):
    """Pad/cast weights once.  w1:(D,H)=c_fc.weight.T, b1:(H,),
    w2:(H,D)=c_proj.weight.T, b2:(D,).  compute_dtype=jnp.bfloat16 gives the
    MXU-native path (f32 GELU / accumulation are kept inside the kernel)."""
    hw = hw or tpu_hw_params()
    dtype = jnp.dtype(compute_dtype) if compute_dtype is not None else jnp.dtype(w1.dtype)
    itemsize = dtype.itemsize
    D, H = w1.shape
    D_pad = _round_up(D, 128)
    n_buf = hw["weight_buffers"]

    # Hidden tile: multiple of 128, floored per generation (keeps the 256-wide
    # MXU full and cuts accumulator RMW per weight byte), capped by the
    # buffered weight-tile budget and by half the VMEM limit.
    th_budget = (hw["weight_budget"] // (n_buf * 2 * D_pad * itemsize)) // 128 * 128
    TH = min(_round_up(H, 128), hw["th_cap"], max(hw["th_floor"], th_budget))
    TH = max(TH, 128)
    while n_buf * 2 * TH * D_pad * itemsize > hw["vmem_limit"] // 2 and TH > 128:
        TH = max(128, (TH // 2) // 128 * 128)
    H_pad = _round_up(H, TH)

    def pad2(a, r, c):
        a = a.astype(dtype)
        if a.shape != (r, c):
            a = jnp.pad(a, ((0, r - a.shape[0]), (0, c - a.shape[1])))
        return a

    return MLPParams(
        w1=pad2(w1, D_pad, H_pad),
        b1=pad2(b1.reshape(1, H), 1, H_pad),
        w2=pad2(w2, H_pad, D_pad),
        b2=pad2(b2.reshape(1, D), 1, D_pad),
        d=D, d_pad=D_pad, h_pad=H_pad, th=TH)


# ---------------------------------------------------------------------------
# Kernel
# ---------------------------------------------------------------------------
def mlp_kernel(x_ref, w1_ref, b1_ref, w2_ref, b2_ref, o_ref, acc_ref):
    # x_ref:  (TM, D_pad)   w1_ref: (D_pad, TH)  b1_ref: (1, TH)
    # w2_ref: (TH, D_pad)   b2_ref: (1, D_pad)   o_ref:  (TM, D_pad)
    # acc_ref: (TM, D_pad) f32 scratch, resident across the H reduction axis.
    h_idx = pl.program_id(1)

    @pl.when(h_idx == 0)
    def _():
        acc_ref[...] = jnp.zeros_like(acc_ref)

    # c_fc slice: x @ W1[:, h*TH:(h+1)*TH] + b1 slice   (MXU, f32 accumulate)
    h = jnp.dot(x_ref[...], w1_ref[...], preferred_element_type=jnp.float32)
    h = h + b1_ref[...].astype(jnp.float32)

    # GELU (tanh approximation) in f32 on VPU/EUP.
    h = _gelu_tanh(h)

    # Partial c_proj: accumulate h_slice @ W2[h*TH:(h+1)*TH, :]
    acc_ref[...] += jnp.dot(h.astype(w2_ref.dtype), w2_ref[...],
                            preferred_element_type=jnp.float32)

    @pl.when(h_idx == pl.num_programs(1) - 1)
    def _():
        o_ref[...] = (acc_ref[...]
                      + b2_ref[...].astype(jnp.float32)).astype(o_ref.dtype)


# ---------------------------------------------------------------------------
# Forward pass
# ---------------------------------------------------------------------------
def mlp_pallas_apply(x, params: MLPParams, *, hw=None):
    """y = c_proj(gelu_tanh(c_fc(x))) for x of shape (..., D)."""
    hw = hw or tpu_hw_params()
    out_dtype = x.dtype
    lead = x.shape[:-1]
    D = x.shape[-1]
    assert D == params.d, (D, params.d)
    M = int(math.prod(lead)) if lead else 1

    D_pad, H_pad, TH = params.d_pad, params.h_pad, params.th
    cdtype = jnp.dtype(params.w1.dtype)
    itemsize = cdtype.itemsize
    sub = 16 if itemsize == 2 else 8
    n_buf = hw["weight_buffers"]
    vmem_limit = int(hw["vmem_limit"])

    # ---- token tile: balanced, VMEM-capped, >=2 tiles on 2-TC parts --------
    weight_bytes = n_buf * (2 * TH * D_pad + TH + D_pad) * itemsize
    row_bytes = D_pad * (4 * itemsize + 4)   # x + out double-buffered + f32 acc
    avail = int(vmem_limit * 0.85) - weight_bytes
    tm_cap = max(sub, (max(avail, 0) // row_bytes) // sub * sub)
    tm_target = max(sub, min(hw["tm_target"], tm_cap))

    n_m = max(1, _cdiv(M, tm_target))
    if hw["num_cores"] > 1 and M >= hw["num_cores"] * 128:
        n_m = _round_up(max(n_m, hw["num_cores"]), hw["num_cores"])
    per_tile = _cdiv(M, n_m)
    align = hw["tm_multiple"] if per_tile >= hw["tm_multiple"] else sub
    TM = _round_up(per_tile, align)
    if TM > tm_cap:
        TM = _round_up(per_tile, sub)
    M_pad = n_m * TM

    # ---- activations: cast + zero-pad (exact for this MLP) -----------------
    x2 = x.reshape(M, D).astype(cdtype)
    if (M_pad, D_pad) != (M, D):
        x2 = jnp.pad(x2, ((0, M_pad - M), (0, D_pad - D)))

    grid = (n_m, H_pad // TH)
    out_bytes = M_pad * D_pad * jnp.dtype(out_dtype).itemsize
    cost = pl.CostEstimate(
        flops=4 * M_pad * D_pad * H_pad,            # two matmuls
        transcendentals=M_pad * H_pad,              # tanh in GELU
        bytes_accessed=int(
            x2.nbytes + out_bytes + params.b2.nbytes
            # W1 / W2 / b1 are re-streamed once per M tile.
            + n_m * (params.w1.nbytes + params.w2.nbytes + params.b1.nbytes)))

    def call(weight_buffers):
        def wspec(shape, imap):
            if weight_buffers > 2:
                return pl.BlockSpec(shape, imap,
                                    pipeline_mode=pl.Buffered(weight_buffers))
            return pl.BlockSpec(shape, imap)

        return pl.pallas_call(
            mlp_kernel,
            out_shape=jax.ShapeDtypeStruct((M_pad, D_pad), out_dtype),
            grid_spec=pltpu.PrefetchScalarGridSpec(
                num_scalar_prefetch=0,
                grid=grid,
                in_specs=[
                    pl.BlockSpec((TM, D_pad), lambda i, h: (i, 0)),   # x tile
                    wspec((D_pad, TH), lambda i, h: (0, h)),          # W1 slice
                    pl.BlockSpec((1, TH), lambda i, h: (0, h)),       # b1 slice
                    wspec((TH, D_pad), lambda i, h: (h, 0)),          # W2 slice
                    pl.BlockSpec((1, D_pad), lambda i, h: (0, 0)),    # b2
                ],
                out_specs=pl.BlockSpec((TM, D_pad), lambda i, h: (i, 0)),
                scratch_shapes=[pltpu.VMEM((TM, D_pad), jnp.float32)],
            ),
            compiler_params=pltpu.CompilerParams(
                dimension_semantics=("parallel", "arbitrary"),
                vmem_limit_bytes=vmem_limit,
            ),
            cost_estimate=cost,
        )(x2, params.w1, params.b1, params.w2, params.b2)

    try:
        out = call(n_buf)
    except Exception:
        if n_buf > 2:
            out = call(2)   # fall back to default double-buffering
        else:
            raise

    out = out[:M, :D]
    return out.reshape(*lead, D)


def mlp_pallas(x, w1, b1, w2, b2, *, compute_dtype=None):
    """One-shot convenience wrapper.  For hot paths, call prepare_mlp_params()
    once and mlp_pallas_apply() per forward so weight padding is hoisted."""
    hw = tpu_hw_params()
    params = prepare_mlp_params(w1, b1, w2, b2, compute_dtype=compute_dtype, hw=hw)
    return mlp_pallas_apply(x, params, hw=hw)


def mlp_reference(x, w1, b1, w2, b2):
    h = jnp.dot(x, w1) + b1
    h = _gelu_tanh(h)
    return jnp.dot(h, w2) + b2


if __name__ == "__main__":
    # config.n_embd = 32  ->  hidden = 4 * 32 = 128
    B, T, D = 2, 8, 32
    H = 4 * D

    key = jax.random.PRNGKey(0)
    kx, kw1, kb1, kw2, kb2 = jax.random.split(key, 5)

    x = jax.random.normal(kx, (B, T, D), dtype=jnp.float32)

    # nn.Linear-style init (uniform +/- 1/sqrt(fan_in)), stored pre-transposed
    # as (in_features, out_features) for the kernel.
    bound1 = 1.0 / math.sqrt(D)
    w1 = jax.random.uniform(kw1, (D, H), minval=-bound1, maxval=bound1,
                            dtype=jnp.float32)
    b1 = jax.random.uniform(kb1, (H,), minval=-bound1, maxval=bound1,
                            dtype=jnp.float32)

    bound2 = 1.0 / math.sqrt(H)
    w2 = jax.random.uniform(kw2, (H, D), minval=-bound2, maxval=bound2,
                            dtype=jnp.float32)
    b2 = jax.random.uniform(kb2, (D,), minval=-bound2, maxval=bound2,
                            dtype=jnp.float32)

    ref = mlp_reference(x, w1, b1, w2, b2)

    # Hot-path style: weights padded once, exact f32 path.
    hw = tpu_hw_params()
    params = prepare_mlp_params(w1, b1, w2, b2, hw=hw)
    out = mlp_pallas_apply(x, params, hw=hw)
    out = jax.block_until_ready(out)
    assert out.shape == (B, T, D)
    assert out.dtype == x.dtype
    assert jnp.allclose(out, ref, atol=1e-5, rtol=1e-5), (
        float(jnp.max(jnp.abs(out - ref))))

    # MXU-native path: f32 inputs, bf16 matmul operands, f32 GELU/accumulation.
    out_bf16 = mlp_pallas(x, w1, b1, w2, b2, compute_dtype=jnp.bfloat16)
    out_bf16 = jax.block_until_ready(out_bf16)
    assert out_bf16.shape == (B, T, D)
    assert jnp.allclose(out_bf16.astype(jnp.float32), ref,
                        atol=1e-1, rtol=5e-2), (
        float(jnp.max(jnp.abs(out_bf16.astype(jnp.float32) - ref))))

    print("KERNEL_OK")
</pallas_src>

<mosaic_0001>
module attributes {stable_mosaic.version = 11 : i64} {
  func.func @mlp_kernel(%arg0: i32, %arg1: i32, %arg2: memref<16x128xf32, #tpu.memory_space<vmem>>, %arg3: memref<128x128xf32, #tpu.memory_space<vmem>>, %arg4: memref<1x128xf32, #tpu.memory_space<vmem>>, %arg5: memref<128x128xf32, #tpu.memory_space<vmem>>, %arg6: memref<1x128xf32, #tpu.memory_space<vmem>>, %arg7: memref<16x128xf32, #tpu.memory_space<vmem>>, %arg8: memref<16x128xf32, #tpu.memory_space<vmem>>) attributes {dimension_semantics = [#tpu.dimension_semantics<parallel>, #tpu.dimension_semantics<arbitrary>], iteration_bounds = array<i64: 1, 1>, scalar_prefetch = 0 : i64, scratch_operands = 1 : i64, tpu.core_type = #tpu.core_type<tc>, window_params = [{transform_indices = @transform_0, window_bounds = array<i64: 16, 128>}, {transform_indices = @transform_1, window_bounds = array<i64: 128, 128>}, {transform_indices = @transform_2, window_bounds = array<i64: 1, 128>}, {transform_indices = @transform_3, window_bounds = array<i64: 128, 128>}, {pipeline_mode = #tpu.pipeline_mode<synchronous>, transform_indices = @transform_4, window_bounds = array<i64: 1, 128>}, {transform_indices = @transform_5, window_bounds = array<i64: 16, 128>}]} {
    %c0_i32 = arith.constant 0 : i32
    %0 = arith.cmpi eq, %arg1, %c0_i32 : i32
    %1 = arith.extui %0 : i1 to i32
    %c0_i32_0 = arith.constant 0 : i32
    %2 = arith.cmpi ne, %1, %c0_i32_0 : i32
    scf.if %2 {
      %cst_19 = arith.constant 0.000000e+00 : f32
      %30 = vector.broadcast %cst_19 : f32 to vector<16x128xf32>
      %c0_20 = arith.constant 0 : index
      %c0_21 = arith.constant 0 : index
      %31 = vector.load %arg8[%c0_20, %c0_21] : memref<16x128xf32, #tpu.memory_space<vmem>>, vector<16x128xf32>
      tpu.vector_store %arg8[%c0_20, %c0_21], %30 {strides = array<i32>} : memref<16x128xf32, #tpu.memory_space<vmem>>, vector<16x128xf32>,
    } else {
    }
    %c0 = arith.constant 0 : index
    %c0_1 = arith.constant 0 : index
    %3 = vector.load %arg2[%c0, %c0_1] : memref<16x128xf32, #tpu.memory_space<vmem>>, vector<16x128xf32>
    %c0_2 = arith.constant 0 : index
    %c0_3 = arith.constant 0 : index
    %4 = vector.load %arg3[%c0_2, %c0_3] : memref<128x128xf32, #tpu.memory_space<vmem>>, vector<128x128xf32>
    %cst = arith.constant dense<0.000000e+00> : vector<16x128xf32>
    %5 = tpu.matmul %3, %4, %cst {dimension_numbers = #tpu.dot_dimension_numbers<[1], [0], [0], [1], [0, 0, 1, 1], [], []>} : vector<16x128xf32>, vector<128x128xf32>, vector<16x128xf32> -> vector<16x128xf32>
    %c0_4 = arith.constant 0 : index
    %c0_5 = arith.constant 0 : index
    %6 = vector.load %arg4[%c0_4, %c0_5] : memref<1x128xf32, #tpu.memory_space<vmem>>, vector<1x128xf32>
    %7 = vector.broadcast %6 : vector<1x128xf32> to vector<16x128xf32>
    %8 = arith.addf %5, %7 : vector<16x128xf32>
    %cst_6 = arith.constant 5.000000e-01 : f32
    %9 = vector.broadcast %cst_6 : f32 to vector<16x128xf32>
    %10 = arith.mulf %9, %8 : vector<16x128xf32>
    %cst_7 = arith.constant 4.471500e-02 : f32
    %11 = vector.broadcast %cst_7 : f32 to vector<16x128xf32>
    %12 = arith.mulf %11, %8 : vector<16x128xf32>
    %13 = arith.mulf %12, %8 : vector<16x128xf32>
    %14 = arith.mulf %13, %8 : vector<16x128xf32>
    %15 = arith.addf %8, %14 : vector<16x128xf32>
    %cst_8 = arith.constant 0.797884583 : f32
    %16 = vector.broadcast %cst_8 : f32 to vector<16x128xf32>
    %17 = arith.mulf %16, %15 : vector<16x128xf32>
    %18 = math.tanh %17 : vector<16x128xf32>
    %cst_9 = arith.constant 1.000000e+00 : f32
    %19 = vector.broadcast %cst_9 : f32 to vector<16x128xf32>
    %20 = arith.addf %19, %18 : vector<16x128xf32>
    %21 = arith.mulf %10, %20 : vector<16x128xf32>
    %c0_10 = arith.constant 0 : index
    %c0_11 = arith.constant 0 : index
    %22 = vector.load %arg8[%c0_10, %c0_11] : memref<16x128xf32, #tpu.memory_space<vmem>>, vector<16x128xf32>
    %c0_12 = arith.constant 0 : index
    %c0_13 = arith.constant 0 : index
    %23 = vector.load %arg5[%c0_12, %c0_13] : memref<128x128xf32, #tpu.memory_space<vmem>>, vector<128x128xf32>
    %cst_14 = arith.constant dense<0.000000e+00> : vector<16x128xf32>
    %24 = tpu.matmul %21, %23, %cst_14 {dimension_numbers = #tpu.dot_dimension_numbers<[1], [0], [0], [1], [0, 0, 1, 1], [], []>} : vector<16x128xf32>, vector<128x128xf32>, vector<16x128xf32> -> vector<16x128xf32>
    %25 = arith.addf %22, %24 : vector<16x128xf32>
    %c0_15 = arith.constant 0 : index
    %c0_16 = arith.constant 0 : index
    %26 = vector.load %arg8[%c0_15, %c0_16] : memref<16x128xf32, #tpu.memory_space<vmem>>, vector<16x128xf32>
    tpu.vector_store %arg8[%c0_15, %c0_16], %25 {strides = array<i32>} : memref<16x128xf32, #tpu.memory_space<vmem>>, vector<16x128xf32>,
    %c0_i32_17 = arith.constant 0 : i32
    %27 = arith.cmpi eq, %arg1, %c0_i32_17 : i32
    %28 = arith.extui %27 : i1 to i32
    %c0_i32_18 = arith.constant 0 : i32
    %29 = arith.cmpi ne, %28, %c0_i32_18 : i32
    scf.if %29 {
      %c0_19 = arith.constant 0 : index
      %c0_20 = arith.constant 0 : index
      %30 = vector.load %arg8[%c0_19, %c0_20] : memref<16x128xf32, #tpu.memory_space<vmem>>, vector<16x128xf32>
      %c0_21 = arith.constant 0 : index
      %c0_22 = arith.constant 0 : index
      %31 = vector.load %arg6[%c0_21, %c0_22] : memref<1x128xf32, #tpu.memory_space<vmem>>, vector<1x128xf32>
      %32 = vector.broadcast %31 : vector<1x128xf32> to vector<16x128xf32>
      %33 = arith.addf %30, %32 : vector<16x128xf32>
      %c0_23 = arith.constant 0 : index
      %c0_24 = arith.constant 0 : index
      %34 = vector.load %arg7[%c0_23, %c0_24] : memref<16x128xf32, #tpu.memory_space<vmem>>, vector<16x128xf32>
      tpu.vector_store %arg7[%c0_23, %c0_24], %33 {strides = array<i32>} : memref<16x128xf32, #tpu.memory_space<vmem>>, vector<16x128xf32>,
    } else {
    }
    return
  }
  func.func @transform_0(%arg0: i32, %arg1: i32) -> (i32, i32) {
    %c0_i32 = arith.constant 0 : i32
    %c0_i32_0 = arith.constant 0 : i32
    return %arg0, %c0_i32 : i32, i32
  }
  func.func @transform_1(%arg0: i32, %arg1: i32) -> (i32, i32) {
    %c0_i32 = arith.constant 0 : i32
    %c0_i32_0 = arith.constant 0 : i32
    return %c0_i32, %arg1 : i32, i32
  }
  func.func @transform_2(%arg0: i32, %arg1: i32) -> (i32, i32) {
    %c0_i32 = arith.constant 0 : i32
    %c0_i32_0 = arith.constant 0 : i32
    return %c0_i32, %arg1 : i32, i32
  }
  func.func @transform_3(%arg0: i32, %arg1: i32) -> (i32, i32) {
    %c0_i32 = arith.constant 0 : i32
    %c0_i32_0 = arith.constant 0 : i32
    return %arg1, %c0_i32 : i32, i32
  }
  func.func @transform_4(%arg0: i32, %arg1: i32) -> (i32, i32) {
    %c0_i32 = arith.constant 0 : i32
    %c0_i32_0 = arith.constant 0 : i32
    %c0_i32_1 = arith.constant 0 : i32
    return %c0_i32, %c0_i32_0 : i32, i32
  }
  func.func @transform_5(%arg0: i32, %arg1: i32) -> (i32, i32) {
    %c0_i32 = arith.constant 0 : i32
    %c0_i32_0 = arith.constant 0 : i32
    return %arg0, %c0_i32 : i32, i32
  }
}

</mosaic_0001>

<llo_original>
// kernel: tpu_custom_call.1
$region0: #{tpu_custom_call.1}
  #allocation0 [shape = 'u32[]', space=smem, size = 0x4, offset = 0x4, fixed_abs, tag = 'smem constant byte address 0x4 - core index']
  #allocation1 [shape = 'u32[72,128]{1,0:T(1,128)}', space=vmem, size = 0x9000, scoped, tag = 'internal scratch']
  #allocation2 [shape = 'f32[16,128]{1,0:T(8,128)}', space=vmem, size = 0x2000, scoped, tag = 'scratch operand']
  %s0 = inlined_call_operand.hbm [shape: f32[16,128], index: 0, kind: input, shape index: {}]
  %s1 = inlined_call_operand.hbm [shape: f32[128,128], index: 1, kind: input, shape index: {}]
  %s2 = inlined_call_operand.vmem [shape: f32[1,128], index: 2, kind: input, shape index: {}]
  %s3 = inlined_call_operand.hbm [shape: f32[128,128], index: 3, kind: input, shape index: {}]
  %s4 = inlined_call_operand.vmem [shape: f32[1,128], index: 4, kind: input, shape index: {}]
  %s5 = inlined_call_operand.hbm [shape: f32[16,128], index: 5, kind: output, shape index: {}]
  %s6 = sld [smem:[#allocation0]]
  $region50: #{tpu_custom_call.1} parent=0
    _
  %s8 = ssub.s32 1, %s6
  %s9 = scalar_select 0, %s8, %s6
  $region1: #{tpu_custom_call.1} parent=0
    #allocation3 [shape = 'u8[8192]{0}', space=vmem, size = 0x2000, scoped, tag = 'input window, operand 0, single buffered']
    #allocation4 [shape = 's32[1]{0}', space=sflag, size = 0x4, scoped, tag = 'scoped memory for tpu_custom_call.1']
    #allocation5 [shape = 's32[1]{0}', space=sflag, size = 0x4, scoped, tag = 'scoped memory for tpu_custom_call.1']
    #allocation6 [shape = 'u8[65536]{0}', space=vmem, size = 0x10000, scoped, tag = 'input window, operand 1, single buffered']
    #allocation7 [shape = 's32[1]{0}', space=sflag, size = 0x4, scoped, tag = 'scoped memory for tpu_custom_call.1']
    #allocation8 [shape = 'u8[65536]{0}', space=vmem, size = 0x10000, scoped, tag = 'input window, operand 3, single buffered']
    #allocation9 [shape = 'u8[8192]{0}', space=vmem, size = 0x2000, scoped, tag = 'output window, operand 0, single buffered']
    %10 = vsyncpa [#allocation4], 0
    %11 = vsyncpa [#allocation7], 0
    %12 = vsyncpa [#allocation5], 0
    // Predicated region
    $region2: #{tpu_custom_call.1} parent=1 // pred_check
      _
    $region3: #{tpu_custom_call.1} parent=1 // pred_check_branch
      %14 = sbr.rel (0) target = $region5
    $region4: #{tpu_custom_call.1} parent=1 // pred_region
      %16 = vsyncadd [#allocation4], 0
      %s17 = sshll.u32 %s0, 4
      %s18 = int_to_ptr.hbm [resolvable:$true] %s17
      %s19 = sshll.u32 [#allocation3], 4
      %s20 = int_to_ptr.vmem [resolvable:$true] %s19
      %25 = dma.hbm_to_vmem [thread:$0]  %s18, 256, %s20, [#allocation4], 128, 128, 8
    $region5: #{tpu_custom_call.1} parent=1 // pred_fallthru
      _
    // Predicated region
    $region6: #{tpu_custom_call.1} parent=1 // pred_check
      _
    $region7: #{tpu_custom_call.1} parent=1 // pred_check_branch
      %27 = sbr.rel (0) target = $region9
    $region8: #{tpu_custom_call.1} parent=1 // pred_region
      %29 = vsyncadd [#allocation7], 0
      %s30 = sshll.u32 %s1, 4
      %s31 = int_to_ptr.hbm [resolvable:$true] %s30
      %s32 = sshll.u32 [#allocation6], 4
      %s33 = int_to_ptr.vmem [resolvable:$true] %s32
      %38 = dma.hbm_to_vmem [thread:$0]  %s31, 2048, %s33, [#allocation7], 128, 128, 8
    $region9: #{tpu_custom_call.1} parent=1 // pred_fallthru
      _
    // Predicated region
    $region10: #{tpu_custom_call.1} parent=1 // pred_check
      _
    $region11: #{tpu_custom_call.1} parent=1 // pred_check_branch
      %40 = sbr.rel (0) target = $region13
    $region12: #{tpu_custom_call.1} parent=1 // pred_region
      _
    $region13: #{tpu_custom_call.1} parent=1 // pred_fallthru
      _
    // Predicated region
    $region14: #{tpu_custom_call.1} parent=1 // pred_check
      _
    $region15: #{tpu_custom_call.1} parent=1 // pred_check_branch
      %42 = sbr.rel (0) target = $region17
    $region16: #{tpu_custom_call.1} parent=1 // pred_region
      %44 = vsyncadd [#allocation7], 0
      %s45 = sshll.u32 %s3, 4
      %s46 = int_to_ptr.hbm [resolvable:$true] %s45
      %s47 = sshll.u32 [#allocation8], 4
      %s48 = int_to_ptr.vmem [resolvable:$true] %s47
      %53 = dma.hbm_to_vmem [thread:$0]  %s46, 2048, %s48, [#allocation7], 128, 128, 8
    $region17: #{tpu_custom_call.1} parent=1 // pred_fallthru
      _
    // Predicated region
    $region18: #{tpu_custom_call.1} parent=1 // pred_check
      _
    $region19: #{tpu_custom_call.1} parent=1 // pred_check_branch
      %55 = sbr.rel (0) target = $region21
    $region20: #{tpu_custom_call.1} parent=1 // pred_region
      _
    $region21: #{tpu_custom_call.1} parent=1 // pred_fallthru
      _
    // Predicated region
    $region22: #{tpu_custom_call.1} parent=1 // pred_check
      _
    $region23: #{tpu_custom_call.1} parent=1 // pred_check_branch
      %57 = sbr.rel (0) target = $region25
    $region24: #{tpu_custom_call.1} parent=1 // pred_region
      %59 = dma.done [#allocation4], 256
    $region25: #{tpu_custom_call.1} parent=1 // pred_fallthru
      _
    // Predicated region
    $region26: #{tpu_custom_call.1} parent=1 // pred_check
      _
    $region27: #{tpu_custom_call.1} parent=1 // pred_check_branch
      %61 = sbr.rel (0) target = $region29
    $region28: #{tpu_custom_call.1} parent=1 // pred_region
      %63 = dma.done [#allocation7], 2048
    $region29: #{tpu_custom_call.1} parent=1 // pred_fallthru
      _
    // Predicated region
    $region30: #{tpu_custom_call.1} parent=1 // pred_check
      _
    $region31: #{tpu_custom_call.1} parent=1 // pred_check_branch
      %65 = sbr.rel (0) target = $region33
    $region32: #{tpu_custom_call.1} parent=1 // pred_region
      %67 = dma.done [#allocation7], 2048
    $region33: #{tpu_custom_call.1} parent=1 // pred_fallthru
      _
    %p68 = scmp.eq.s32.totalorder 0, 0
    // Predicated region
    $region34: #{tpu_custom_call.1} parent=1 // pred_check
      %p69 = pneg %p68
    $region35: #{tpu_custom_call.1} parent=1 // pred_check_branch
      %71 = sbr.rel (%p69) target = $region37
    $region36: #{tpu_custom_call.1} parent=1 // pred_region
      %72 = vst [vmem:[#allocation2] sm:$0xff] 0.0
      %73 = vst [vmem:[#allocation2 + $0x8] sm:$0xff] 0.0
    $region37: #{tpu_custom_call.1} parent=1 // pred_fallthru
      _
    %v74 = vld [vmem:[#allocation3] sm:$0xff]
    %v75 = vld [vmem:[#allocation3 + $0x8] sm:$0xff]
    %v76 = vld [vmem:[#allocation6] sm:$0xff]
    %v77 = vld [vmem:[#allocation6 + $0x8] sm:$0xff]
    %v78 = vld [vmem:[#allocation6 + $0x10] sm:$0xff]
    %v79 = vld [vmem:[#allocation6 + $0x18] sm:$0xff]
    %v80 = vld [vmem:[#allocation6 + $0x20] sm:$0xff]
    %v81 = vld [vmem:[#allocation6 + $0x28] sm:$0xff]
    %v82 = vld [vmem:[#allocation6 + $0x30] sm:$0xff]
    %v83 = vld [vmem:[#allocation6 + $0x38] sm:$0xff]
    %v84 = vld [vmem:[#allocation6 + $0x40] sm:$0xff]
    %v85 = vld [vmem:[#allocation6 + $0x48] sm:$0xff]
    %v86 = vld [vmem:[#allocation6 + $0x50] sm:$0xff]
    %v87 = vld [vmem:[#allocation6 + $0x58] sm:$0xff]
    %v88 = vld [vmem:[#allocation6 + $0x60] sm:$0xff]
    %v89 = vld [vmem:[#allocation6 + $0x68] sm:$0xff]
    %v90 = vld [vmem:[#allocation6 + $0x70] sm:$0xff]
    %v91 = vld [vmem:[#allocation6 + $0x78] sm:$0xff]
    %v92 = vld [vmem:[%s2] sm:$0x1]
    %v94 = vperm.slane %v92, 0
    %96 = vmatpush.msra.mxu0 %v91
    %97 = vmatpush.msra.mxu0 %v90
    %98 = vmatpush.msra.mxu0 %v89
    %99 = vmatpush.msra.mxu0 %v88
    %100 = vmatpush.msra.mxu0 %v87
    %101 = vmatpush.msra.mxu0 %v86
    %102 = vmatpush.msra.mxu0 %v85
    %103 = vmatpush.msra.mxu0 %v84
    %104 = vmatpush.msra.mxu0 %v83
    %105 = vmatpush.msra.mxu0 %v82
    %106 = vmatpush.msra.mxu0 %v81
    %107 = vmatpush.msra.mxu0 %v80
    %108 = vmatpush.msra.mxu0 %v79
    %109 = vmatpush.msra.mxu0 %v78
    %110 = vmatpush.msra.mxu0 %v77
    %111 = vmatpush.msra.mxu0 %v76
    %112 = vmatmul.f32.gmra.mxu0 %v74
    %v113 = vpop.f32.mrf.mxu0
    %v114 = vadd.f32 %v94, %v113
    %115 = vmatmul.f32.gmra.mxu0 %v75
    %v116 = vpop.f32.mrf.mxu0
    %v117 = vadd.f32 %v94, %v116
    %118 = vdwg.mxu0
    %v119 = vmul.f32 %v114, 0.5
    %v120 = vmul.f32 %v117, 0.5
    %v121 = vmul.f32 %v114, 0.044715
    %v122 = vmul.f32 %v117, 0.044715
    %v123 = vmul.f32 %v121, %v114
    %v124 = vmul.f32 %v122, %v117
    %v125 = vmul.f32 %v123, %v114
    %v126 = vmul.f32 %v124, %v117
    %v127 = vadd.f32 %v114, %v125
    %v128 = vadd.f32 %v117, %v126
    %v129 = vmul.f32 %v127, 0.7978846
    %v130 = vmul.f32 %v128, 0.7978846
    %v131 = vtanh.pop %v129
    %v132 = vtanh.pop %v130
    %v133 = vadd.f32 %v131, 1.0
    %v134 = vadd.f32 %v132, 1.0
    %v135 = vmul.f32 %v119, %v133
    %v136 = vmul.f32 %v120, %v134
    %v137 = vld [vmem:[#allocation2] sm:$0xff]
    %v138 = vld [vmem:[#allocation2 + $0x8] sm:$0xff]
    %v139 = vld [vmem:[#allocation8] sm:$0xff]
    %v140 = vld [vmem:[#allocation8 + $0x8] sm:$0xff]
    %v141 = vld [vmem:[#allocation8 + $0x10] sm:$0xff]
    %v142 = vld [vmem:[#allocation8 + $0x18] sm:$0xff]
    %v143 = vld [vmem:[#allocation8 + $0x20] sm:$0xff]
    %v144 = vld [vmem:[#allocation8 + $0x28] sm:$0xff]
    %v145 = vld [vmem:[#allocation8 + $0x30] sm:$0xff]
    %v146 = vld [vmem:[#allocation8 + $0x38] sm:$0xff]
    %v147 = vld [vmem:[#allocation8 + $0x40] sm:$0xff]
    %v148 = vld [vmem:[#allocation8 + $0x48] sm:$0xff]
    %v149 = vld [vmem:[#allocation8 + $0x50] sm:$0xff]
    %v150 = vld [vmem:[#allocation8 + $0x58] sm:$0xff]
    %v151 = vld [vmem:[#allocation8 + $0x60] sm:$0xff]
    %v152 = vld [vmem:[#allocation8 + $0x68] sm:$0xff]
    %v153 = vld [vmem:[#allocation8 + $0x70] sm:$0xff]
    %v154 = vld [vmem:[#allocation8 + $0x78] sm:$0xff]
    %155 = vmatpush.msra.mxu0 %v154
    %156 = vmatpush.msra.mxu0 %v153
    %157 = vmatpush.msra.mxu0 %v152
    %158 = vmatpush.msra.mxu0 %v151
    %159 = vmatpush.msra.mxu0 %v150
    %160 = vmatpush.msra.mxu0 %v149
    %161 = vmatpush.msra.mxu0 %v148
    %162 = vmatpush.msra.mxu0 %v147
    %163 = vmatpush.msra.mxu0 %v146
    %164 = vmatpush.msra.mxu0 %v145
    %165 = vmatpush.msra.mxu0 %v144
    %166 = vmatpush.msra.mxu0 %v143
    %167 = vmatpush.msra.mxu0 %v142
    %168 = vmatpush.msra.mxu0 %v141
    %169 = vmatpush.msra.mxu0 %v140
    %170 = vmatpush.msra.mxu0 %v139
    %171 = vmatmul.f32.gmra.mxu0 %v135
    %v172 = vpop.f32.mrf.mxu0
    %v173 = vadd.f32 0.0, %v172
    %174 = vmatmul.f32.gmra.mxu0 %v136
    %v175 = vpop.f32.mrf.mxu0
    %v176 = vadd.f32 0.0, %v175
    %177 = vdwg.mxu0
    %v178 = vadd.f32 %v137, %v173
    %v179 = vadd.f32 %v138, %v176
    %180 = vst [vmem:[#allocation2] sm:$0xff] %v178
    %181 = vst [vmem:[#allocation2 + $0x8] sm:$0xff] %v179
    // Predicated region
    $region38: #{tpu_custom_call.1} parent=1 // pred_check
      %p182 = pneg %p68
    $region39: #{tpu_custom_call.1} parent=1 // pred_check_branch
      %184 = sbr.rel (%p182) target = $region41
    $region40: #{tpu_custom_call.1} parent=1 // pred_region
      %v185 = vld [vmem:[#allocation2] sm:$0xff]
      %v186 = vld [vmem:[#allocation2 + $0x8] sm:$0xff]
      %v187 = vld [vmem:[%s4] sm:$0x1]
      %v189 = vperm.slane %v187, 0
      %v191 = vadd.f32 %v185, %v189
      %v192 = vadd.f32 %v186, %v189
      %193 = vst [vmem:[#allocation9] sm:$0xff] %v191
      %194 = vst [vmem:[#allocation9 + $0x8] sm:$0xff] %v192
    $region41: #{tpu_custom_call.1} parent=1 // pred_fallthru
      _
    // Predicated region
    $region42: #{tpu_custom_call.1} parent=1 // pred_check
      _
    $region43: #{tpu_custom_call.1} parent=1 // pred_check_branch
      %196 = sbr.rel (0) target = $region45
    $region44: #{tpu_custom_call.1} parent=1 // pred_region
      %198 = vsyncadd [#allocation5], 0
      %s199 = sshll.u32 [#allocation9], 4
      %s200 = int_to_ptr.vmem [resolvable:$true] %s199
      %s201 = sshll.u32 %s5, 4
      %s202 = int_to_ptr.hbm [resolvable:$true] %s201
      %207 = dma.vmem_to_hbm [thread:$0]  %s200, 256, %s202, [#allocation5], 128, 128, 8
    $region45: #{tpu_custom_call.1} parent=1 // pred_fallthru
      _
    // Predicated region
    $region46: #{tpu_custom_call.1} parent=1 // pred_check
      _
    $region47: #{tpu_custom_call.1} parent=1 // pred_check_branch
      %209 = sbr.rel (0) target = $region49
    $region48: #{tpu_custom_call.1} parent=1 // pred_region
      %211 = dma.done [#allocation5], 256
    $region49: #{tpu_custom_call.1} parent=1 // pred_fallthru
      _
    %212 = vsyncpa [#allocation4], 1
    %213 = vsyncpa [#allocation7], 1
    %214 = vsyncpa [#allocation5], 1

</llo_original>
